<compile_context>
chip_gen: v7x
topology: tpu7x:2x2x1
jax: 0.10.0
libtpu: 0.0.40
codegen_flags: <defaults>
</compile_context>

<pallas_src>
import math

import jax
import jax.numpy as jnp
from jax.experimental import pallas as pl
from jax.experimental.pallas import tpu as pltpu

_SQRT_2_OVER_PI = math.sqrt(2.0 / math.pi)
_GELU_COEF = 0.044715
# Folded constants: inner = x * (_A * x^2 + _B)
_A = _SQRT_2_OVER_PI * _GELU_COEF
_B = _SQRT_2_OVER_PI

# ~2 MiB per buffer (per operand, per pipeline stage).  With default
# double-buffering of one input + one output: ~8 MiB scoped VMEM.
_TARGET_TILE_BYTES = 2 * 1024 * 1024

_LANE_CANDIDATES = (4096, 2048, 1024, 512, 256, 128)


def _gelu_kernel(x_ref, o_ref):
    # f32 math internally (at least as accurate as the torch formula for bf16
    # inputs), cast back on store.  Constant-folded form keeps VPU work low;
    # tanh runs on the EUP slot, which has huge headroom for a mem-bound op.
    x = x_ref[...].astype(jnp.float32)
    inner = x * (_A * (x * x) + _B)
    o_ref[...] = (x * (0.5 + 0.5 * jnp.tanh(inner))).astype(o_ref.dtype)


def _gelu_jnp(x):
    # Plain-JAX fallback (single fused XLA elementwise op, one HBM pass).
    xf = x.astype(jnp.float32)
    y = xf * (0.5 + 0.5 * jnp.tanh(xf * (_A * (xf * xf) + _B)))
    return y.astype(x.dtype)


def vit_gelu(x: jax.Array) -> jax.Array:
    """Applies tanh-approximation GELU element-wise (ViTGELUActFun.forward)."""
    if not jnp.issubdtype(x.dtype, jnp.floating):
        # torch.tanh also rejects integer tensors; keep float-only semantics.
        raise TypeError(f"vit_gelu supports floating dtypes only, got {x.dtype}")

    orig_shape = x.shape
    n = x.size
    if n == 0:
        return x

    # Rare fallback: element count not a multiple of 128.  One fused XLA
    # elementwise op is one HBM pass -- cheaper than pad + kernel + slice.
    if n % 128 != 0:
        return _gelu_jnp(x)

    itemsize = jnp.dtype(x.dtype).itemsize
    sublane = max(8, 32 // itemsize)  # 8 (f32) / 16 (bf16) / 32 (fp8)

    # Widest lane count that divides n exactly -> lane-dense rows, unmasked
    # full-width vector stores, no padding, no output slice.
    lanes = next(w for w in _LANE_CANDIDATES if n % w == 0)
    rows = n // lanes
    x2d = x.reshape(rows, lanes)  # row-major reshape: metadata-only for contiguous x

    # Byte-sized tile target (dtype-aware), rounded down to the sublane multiple.
    target_rows = max(
        sublane, (_TARGET_TILE_BYTES // (lanes * itemsize)) // sublane * sublane
    )

    if rows < 2 * sublane:
        # Too small to split into legal (multiple-of-8) row blocks: one
        # full-extent block (always valid, even if rows is not a multiple of 8).
        tile_rows = rows
    else:
        # >=2 near-equal blocks: lets the "parallel" grid axis shard across
        # v7x's two TensorCores and avoids a sliver-sized trailing block
        # (e.g. 144 rows -> 72+72 instead of 128+16).
        num_blocks = max(2, pl.cdiv(rows, target_rows))
        tile_rows = pl.cdiv(rows, num_blocks)
        tile_rows = pl.cdiv(tile_rows, sublane) * sublane
        tile_rows = min(tile_rows, rows)

    grid = (pl.cdiv(rows, tile_rows),)

    out2d = pl.pallas_call(
        _gelu_kernel,
        out_shape=jax.ShapeDtypeStruct((rows, lanes), x.dtype),
        grid_spec=pltpu.PrefetchScalarGridSpec(
            num_scalar_prefetch=0,
            grid=grid,
            in_specs=[pl.BlockSpec((tile_rows, lanes), lambda i: (i, 0))],
            out_specs=pl.BlockSpec((tile_rows, lanes), lambda i: (i, 0)),
        ),
        compiler_params=pltpu.CompilerParams(
            dimension_semantics=("parallel",),
        ),
    )(x2d)

    return out2d.reshape(orig_shape)


def _gelu_ref(x):
    xf = x.astype(jnp.float32)
    y = 0.5 * xf * (1.0 + jnp.tanh(_SQRT_2_OVER_PI * (xf + _GELU_COEF * jnp.power(xf, 3.0))))
    return y.astype(x.dtype)


if __name__ == "__main__":
    key = jax.random.PRNGKey(0)
    k1, k2, k3, k4 = jax.random.split(key, 4)

    # Primary: small NCHW f32 tensor (ViT conv-stage layout) -> single
    # full-extent block.
    x = jax.random.normal(k1, (2, 4, 16, 16), dtype=jnp.float32)
    out = jax.block_until_ready(vit_gelu(x))
    assert out.shape == x.shape and out.dtype == x.dtype
    assert jnp.allclose(out, _gelu_ref(x), atol=2e-5, rtol=2e-5)

    # Larger f32 tensor: lanes=4096, 144 rows -> two balanced 72-row blocks.
    xb = jax.random.normal(k2, (1, 4, 384, 384), dtype=jnp.float32)
    outb = jax.block_until_ready(vit_gelu(xb))
    assert jnp.allclose(outb, _gelu_ref(xb), atol=2e-5, rtol=2e-5)

    # bf16 ViT MLP activation shape: exercises the dtype-aware (byte-sized)
    # tile target and a masked partial trailing block.
    xh = jax.random.normal(k3, (8, 196, 768), dtype=jnp.bfloat16)
    outh = jax.block_until_ready(vit_gelu(xh))
    assert outh.dtype == jnp.bfloat16 and outh.shape == xh.shape
    assert jnp.allclose(outh.astype(jnp.float32), _gelu_ref(xh).astype(jnp.float32),
                        atol=5e-2, rtol=2e-2)

    # Fallback path: element count not a multiple of 128 (single fused jnp pass).
    xr = jax.random.normal(k4, (3, 5, 7), dtype=jnp.float32)
    outr = jax.block_until_ready(vit_gelu(xr))
    assert outr.shape == xr.shape
    assert jnp.allclose(outr, _gelu_ref(xr), atol=2e-5, rtol=2e-5)

    print("KERNEL_OK")
</pallas_src>

<mosaic_0001>
module attributes {stable_mosaic.version = 11 : i64} {
  func.func @_gelu_kernel(%arg0: i32, %arg1: memref<1x2048xf32, #tpu.memory_space<vmem>>, %arg2: memref<1x2048xf32, #tpu.memory_space<vmem>>) attributes {dimension_semantics = [#tpu.dimension_semantics<parallel>], iteration_bounds = array<i64: 1>, scalar_prefetch = 0 : i64, scratch_operands = 0 : i64, tpu.core_type = #tpu.core_type<tc>, window_params = [{transform_indices = @transform_0, window_bounds = array<i64: 1, 2048>}, {transform_indices = @transform_1, window_bounds = array<i64: 1, 2048>}]} {
    %c0 = arith.constant 0 : index
    %c0_0 = arith.constant 0 : index
    %0 = vector.load %arg1[%c0, %c0_0] : memref<1x2048xf32, #tpu.memory_space<vmem>>, vector<1x2048xf32>
    %1 = arith.mulf %0, %0 : vector<1x2048xf32>
    %cst = arith.constant 0.0356774069 : f32
    %2 = vector.broadcast %cst : f32 to vector<1x2048xf32>
    %3 = arith.mulf %2, %1 : vector<1x2048xf32>
    %cst_1 = arith.constant 0.797884583 : f32
    %4 = vector.broadcast %cst_1 : f32 to vector<1x2048xf32>
    %5 = arith.addf %3, %4 : vector<1x2048xf32>
    %6 = arith.mulf %0, %5 : vector<1x2048xf32>
    %7 = math.tanh %6 : vector<1x2048xf32>
    %cst_2 = arith.constant 5.000000e-01 : f32
    %8 = vector.broadcast %cst_2 : f32 to vector<1x2048xf32>
    %9 = arith.mulf %8, %7 : vector<1x2048xf32>
    %cst_3 = arith.constant 5.000000e-01 : f32
    %10 = vector.broadcast %cst_3 : f32 to vector<1x2048xf32>
    %11 = arith.addf %10, %9 : vector<1x2048xf32>
    %12 = arith.mulf %0, %11 : vector<1x2048xf32>
    %c0_4 = arith.constant 0 : index
    %c0_5 = arith.constant 0 : index
    %13 = vector.load %arg2[%c0_4, %c0_5] : memref<1x2048xf32, #tpu.memory_space<vmem>>, vector<1x2048xf32>
    tpu.vector_store %arg2[%c0_4, %c0_5], %12 {strides = array<i32>} : memref<1x2048xf32, #tpu.memory_space<vmem>>, vector<1x2048xf32>,
    return
  }
  func.func @transform_0(%arg0: i32) -> (i32, i32) {
    %c0_i32 = arith.constant 0 : i32
    %c0_i32_0 = arith.constant 0 : i32
    return %arg0, %c0_i32 : i32, i32
  }
  func.func @transform_1(%arg0: i32) -> (i32, i32) {
    %c0_i32 = arith.constant 0 : i32
    %c0_i32_0 = arith.constant 0 : i32
    return %arg0, %c0_i32 : i32, i32
  }
}

</mosaic_0001>

<llo_original>
// kernel: tpu_custom_call.1
$region0: #{tpu_custom_call.1}
  #allocation0 [shape = 'u32[]', space=smem, size = 0x4, offset = 0x4, fixed_abs, tag = 'smem constant byte address 0x4 - core index']
  #allocation1 [shape = 'u32[144,128]{1,0:T(1,128)}', space=vmem, size = 0x12000, scoped, tag = 'internal scratch']
  %s0 = inlined_call_operand.hbm [shape: f32[1,2048], index: 0, kind: input, shape index: {}]
  %s1 = inlined_call_operand.hbm [shape: f32[1,2048], index: 1, kind: output, shape index: {}]
  %s2 = sld [smem:[#allocation0]]
  $region18: #{tpu_custom_call.1} parent=0
    _
  %s4 = ssub.s32 1, %s2
  %s5 = scalar_select 0, %s4, %s2
  $region1: #{tpu_custom_call.1} parent=0
    #allocation2 [shape = 'u8[8192]{0}', space=vmem, size = 0x2000, scoped, tag = 'input window, operand 0, single buffered']
    #allocation3 [shape = 's32[1]{0}', space=sflag, size = 0x4, scoped, tag = 'scoped memory for tpu_custom_call.1']
    #allocation4 [shape = 's32[1]{0}', space=sflag, size = 0x4, scoped, tag = 'scoped memory for tpu_custom_call.1']
    #allocation5 [shape = 'u8[8192]{0}', space=vmem, size = 0x2000, scoped, tag = 'output window, operand 0, single buffered']
    %6 = vsyncpa [#allocation3], 0
    %7 = vsyncpa [#allocation4], 0
    // Predicated region
    $region2: #{tpu_custom_call.1} parent=1 // pred_check
      _
    $region3: #{tpu_custom_call.1} parent=1 // pred_check_branch
      %9 = sbr.rel (0) target = $region5
    $region4: #{tpu_custom_call.1} parent=1 // pred_region
      %s11 = ssub.s32 256, 256
      %12 = vsyncadd [#allocation3], %s11
      %s14 = sshll.u32 [#allocation2], 4
      %s15 = int_to_ptr.vmem [resolvable:$true] %s14
      %17 = dma.hbm_to_vmem [thread:$0]  %s0, 256, %s15, [#allocation3]
    $region5: #{tpu_custom_call.1} parent=1 // pred_fallthru
      _
    // Predicated region
    $region6: #{tpu_custom_call.1} parent=1 // pred_check
      _
    $region7: #{tpu_custom_call.1} parent=1 // pred_check_branch
      %19 = sbr.rel (0) target = $region9
    $region8: #{tpu_custom_call.1} parent=1 // pred_region
      %20 = dma.done [#allocation3], 256
    $region9: #{tpu_custom_call.1} parent=1 // pred_fallthru
      _
    %v21 = vld [vmem:[#allocation2] sm:$0xff]
    %v22 = vld [vmem:[#allocation2 + $0x8] sm:$0xff]
    %v23 = vmul.f32 %v21, %v21
    %v24 = vmul.f32 %v22, %v22
    %v25 = vmul.f32 %v23, 0.035677407
    %v26 = vmul.f32 %v24, 0.035677407
    %v27 = vadd.f32 %v25, 0.7978846
    %v28 = vadd.f32 %v26, 0.7978846
    %v29 = vmul.f32 %v21, %v27
    %v30 = vmul.f32 %v22, %v28
    %v31 = vtanh.pop %v29
    %v32 = vtanh.pop %v30
    %v33 = vmul.f32 %v31, 0.5
    %v34 = vmul.f32 %v32, 0.5
    %v35 = vadd.f32 %v33, 0.5
    %v36 = vadd.f32 %v34, 0.5
    %v37 = vmul.f32 %v21, %v35
    %v38 = vmul.f32 %v22, %v36
    %39 = vst [vmem:[#allocation5] sm:$0xff] %v37
    %40 = vst [vmem:[#allocation5 + $0x8] sm:$0xff] %v38
    // Predicated region
    $region10: #{tpu_custom_call.1} parent=1 // pred_check
      _
    $region11: #{tpu_custom_call.1} parent=1 // pred_check_branch
      %42 = sbr.rel (0) target = $region13
    $region12: #{tpu_custom_call.1} parent=1 // pred_region
      %s44 = ssub.s32 256, 256
      %45 = vsyncadd [#allocation4], %s44
      %s47 = sshll.u32 [#allocation5], 4
      %s48 = int_to_ptr.vmem [resolvable:$true] %s47
      %50 = dma.vmem_to_hbm [thread:$0]  %s48, 256, %s1, [#allocation4]
    $region13: #{tpu_custom_call.1} parent=1 // pred_fallthru
      _
    // Predicated region
    $region14: #{tpu_custom_call.1} parent=1 // pred_check
      _
    $region15: #{tpu_custom_call.1} parent=1 // pred_check_branch
      %52 = sbr.rel (0) target = $region17
    $region16: #{tpu_custom_call.1} parent=1 // pred_region
      %53 = dma.done [#allocation4], 256
    $region17: #{tpu_custom_call.1} parent=1 // pred_fallthru
      _
    %54 = vsyncpa [#allocation3], 1
    %55 = vsyncpa [#allocation4], 1

</llo_original>
